<compile_context>
chip_gen: v7x
topology: tpu7x:2x2x1
jax: 0.10.0
libtpu: 0.0.40
codegen_flags: <defaults>
</compile_context>

<pallas_src>
import jax
import jax.numpy as jnp
from jax.experimental import pallas as pl
from jax.experimental.pallas import tpu as pltpu  # noqa: F401  (TPU backend import)

N_SAMPLES = 2 ** 14            # 16384
SLAB_ROWS = 8                  # one vreg of sublanes
SLAB_COLS = N_SAMPLES // SLAB_ROWS   # 2048 lanes -> fully lane-dense, unmasked stores


def _emit_param_kernel(audio_ref, out_ref):
    # Parameter-emit hot path: single whole-slab VMEM copy (one block, no grid loop).
    out_ref[...] = audio_ref[...]


def model_forward(x, audio_param):
    """Reproduces Model.forward: returns the audio parameter, ignoring x.

    x:           any array (unused, kept for signature parity with the module)
    audio_param: (1, 1, N_SAMPLES) float32
    returns:     (1, 1, N_SAMPLES) float32
    """
    del x  # forward ignores its input, exactly like the PyTorch module
    slab = audio_param.reshape(SLAB_ROWS, SLAB_COLS)

    out_slab = pl.pallas_call(
        _emit_param_kernel,
        out_shape=jax.ShapeDtypeStruct((SLAB_ROWS, SLAB_COLS), audio_param.dtype),
        # No grid: a single invocation over the full (8, 2048) slab.
        in_specs=[pl.BlockSpec((SLAB_ROWS, SLAB_COLS), lambda: (0, 0))],
        out_specs=pl.BlockSpec((SLAB_ROWS, SLAB_COLS), lambda: (0, 0)),
        cost_estimate=pl.CostEstimate(
            flops=0, transcendentals=0, bytes_accessed=2 * N_SAMPLES * 4),
    )(slab)

    return out_slab.reshape(1, 1, N_SAMPLES)


def init_audio_param(key):
    # Matches nn.Parameter(torch.zeros(1, 1, n_samples).uniform_(-0.01, 0.01))
    return jax.random.uniform(
        key, (1, 1, N_SAMPLES), dtype=jnp.float32, minval=-0.01, maxval=0.01)


if __name__ == "__main__":
    key = jax.random.PRNGKey(0)
    k_param, k_x = jax.random.split(key)

    audio = init_audio_param(k_param)
    # Example input (unused by forward, mirroring the PyTorch module's behavior).
    x = jax.random.normal(k_x, (2, 4, 16, 16), dtype=jnp.float32)

    out = model_forward(x, audio)
    out = jax.block_until_ready(out)

    assert out.shape == (1, 1, N_SAMPLES)
    assert jnp.allclose(out, audio)
    print("KERNEL_OK")
</pallas_src>

<mosaic_0001>
module attributes {stable_mosaic.version = 11 : i64} {
  func.func @_emit_param_kernel(%arg0: memref<8x2048xf32, #tpu.memory_space<vmem>>, %arg1: memref<8x2048xf32, #tpu.memory_space<vmem>>) attributes {dimension_semantics = [], scalar_prefetch = 0 : i64, scratch_operands = 0 : i64, tpu.core_type = #tpu.core_type<tc>} {
    %c0 = arith.constant 0 : index
    %c0_0 = arith.constant 0 : index
    %0 = vector.load %arg0[%c0, %c0_0] : memref<8x2048xf32, #tpu.memory_space<vmem>>, vector<8x2048xf32>
    %c0_1 = arith.constant 0 : index
    %c0_2 = arith.constant 0 : index
    %1 = vector.load %arg1[%c0_1, %c0_2] : memref<8x2048xf32, #tpu.memory_space<vmem>>, vector<8x2048xf32>
    tpu.vector_store %arg1[%c0_1, %c0_2], %0 {strides = array<i32>} : memref<8x2048xf32, #tpu.memory_space<vmem>>, vector<8x2048xf32>,
    return
  }
}

</mosaic_0001>

<llo_original>
// kernel: tpu_custom_call.1
$region0: #{tpu_custom_call.1}
  #allocation0 [shape = 'u32[]', space=smem, size = 0x4, offset = 0x4, fixed_abs, tag = 'smem constant byte address 0x4 - core index']
  #allocation1 [shape = 'u32[144,128]{1,0:T(1,128)}', space=vmem, size = 0x12000, scoped, tag = 'internal scratch']
  %s0 = inlined_call_operand.hbm [shape: f32[8,2048], index: 0, kind: input, shape index: {}]
  %s1 = inlined_call_operand.hbm [shape: f32[8,2048], index: 1, kind: output, shape index: {}]
  %s2 = sld [smem:[#allocation0]]
  $region18: #{tpu_custom_call.1} parent=0
    _
  %s4 = ssub.s32 1, %s2
  %s5 = scalar_select 0, %s4, %s2
  $region1: #{tpu_custom_call.1} parent=0
    #allocation2 [shape = 'u8[65536]{0}', space=vmem, size = 0x10000, scoped, tag = 'input window, operand 0, single buffered']
    #allocation3 [shape = 's32[1]{0}', space=sflag, size = 0x4, scoped, tag = 'scoped memory for tpu_custom_call.1']
    #allocation4 [shape = 's32[1]{0}', space=sflag, size = 0x4, scoped, tag = 'scoped memory for tpu_custom_call.1']
    #allocation5 [shape = 'u8[65536]{0}', space=vmem, size = 0x10000, scoped, tag = 'output window, operand 0, single buffered']
    %6 = vsyncpa [#allocation3], 0
    %7 = vsyncpa [#allocation4], 0
    // Predicated region
    $region2: #{tpu_custom_call.1} parent=1 // pred_check
      _
    $region3: #{tpu_custom_call.1} parent=1 // pred_check_branch
      %9 = sbr.rel (0) target = $region5
    $region4: #{tpu_custom_call.1} parent=1 // pred_region
      %s11 = ssub.s32 2048, 2048
      %12 = vsyncadd [#allocation3], %s11
      %s14 = sshll.u32 [#allocation2], 4
      %s15 = int_to_ptr.vmem [resolvable:$true] %s14
      %17 = dma.hbm_to_vmem [thread:$0]  %s0, 2048, %s15, [#allocation3]
    $region5: #{tpu_custom_call.1} parent=1 // pred_fallthru
      _
    // Predicated region
    $region6: #{tpu_custom_call.1} parent=1 // pred_check
      _
    $region7: #{tpu_custom_call.1} parent=1 // pred_check_branch
      %19 = sbr.rel (0) target = $region9
    $region8: #{tpu_custom_call.1} parent=1 // pred_region
      %20 = dma.done [#allocation3], 2048
    $region9: #{tpu_custom_call.1} parent=1 // pred_fallthru
      _
    %v21 = vld [vmem:[#allocation2] sm:$0xff]
    %v22 = vld [vmem:[#allocation2 + $0x8] sm:$0xff]
    %v23 = vld [vmem:[#allocation2 + $0x10] sm:$0xff]
    %v24 = vld [vmem:[#allocation2 + $0x18] sm:$0xff]
    %v25 = vld [vmem:[#allocation2 + $0x20] sm:$0xff]
    %v26 = vld [vmem:[#allocation2 + $0x28] sm:$0xff]
    %v27 = vld [vmem:[#allocation2 + $0x30] sm:$0xff]
    %v28 = vld [vmem:[#allocation2 + $0x38] sm:$0xff]
    %v29 = vld [vmem:[#allocation2 + $0x40] sm:$0xff]
    %v30 = vld [vmem:[#allocation2 + $0x48] sm:$0xff]
    %v31 = vld [vmem:[#allocation2 + $0x50] sm:$0xff]
    %v32 = vld [vmem:[#allocation2 + $0x58] sm:$0xff]
    %v33 = vld [vmem:[#allocation2 + $0x60] sm:$0xff]
    %v34 = vld [vmem:[#allocation2 + $0x68] sm:$0xff]
    %v35 = vld [vmem:[#allocation2 + $0x70] sm:$0xff]
    %v36 = vld [vmem:[#allocation2 + $0x78] sm:$0xff]
    %37 = vst [vmem:[#allocation5] sm:$0xff] %v21
    %38 = vst [vmem:[#allocation5 + $0x8] sm:$0xff] %v22
    %39 = vst [vmem:[#allocation5 + $0x10] sm:$0xff] %v23
    %40 = vst [vmem:[#allocation5 + $0x18] sm:$0xff] %v24
    %41 = vst [vmem:[#allocation5 + $0x20] sm:$0xff] %v25
    %42 = vst [vmem:[#allocation5 + $0x28] sm:$0xff] %v26
    %43 = vst [vmem:[#allocation5 + $0x30] sm:$0xff] %v27
    %44 = vst [vmem:[#allocation5 + $0x38] sm:$0xff] %v28
    %45 = vst [vmem:[#allocation5 + $0x40] sm:$0xff] %v29
    %46 = vst [vmem:[#allocation5 + $0x48] sm:$0xff] %v30
    %47 = vst [vmem:[#allocation5 + $0x50] sm:$0xff] %v31
    %48 = vst [vmem:[#allocation5 + $0x58] sm:$0xff] %v32
    %49 = vst [vmem:[#allocation5 + $0x60] sm:$0xff] %v33
    %50 = vst [vmem:[#allocation5 + $0x68] sm:$0xff] %v34
    %51 = vst [vmem:[#allocation5 + $0x70] sm:$0xff] %v35
    %52 = vst [vmem:[#allocation5 + $0x78] sm:$0xff] %v36
    // Predicated region
    $region10: #{tpu_custom_call.1} parent=1 // pred_check
      _
    $region11: #{tpu_custom_call.1} parent=1 // pred_check_branch
      %54 = sbr.rel (0) target = $region13
    $region12: #{tpu_custom_call.1} parent=1 // pred_region
      %s56 = ssub.s32 2048, 2048
      %57 = vsyncadd [#allocation4], %s56
      %s59 = sshll.u32 [#allocation5], 4
      %s60 = int_to_ptr.vmem [resolvable:$true] %s59
      %62 = dma.vmem_to_hbm [thread:$0]  %s60, 2048, %s1, [#allocation4]
    $region13: #{tpu_custom_call.1} parent=1 // pred_fallthru
      _
    // Predicated region
    $region14: #{tpu_custom_call.1} parent=1 // pred_check
      _
    $region15: #{tpu_custom_call.1} parent=1 // pred_check_branch
      %64 = sbr.rel (0) target = $region17
    $region16: #{tpu_custom_call.1} parent=1 // pred_region
      %65 = dma.done [#allocation4], 2048
    $region17: #{tpu_custom_call.1} parent=1 // pred_fallthru
      _
    %66 = vsyncpa [#allocation3], 1
    %67 = vsyncpa [#allocation4], 1

</llo_original>
